<compile_context>
chip_gen: v5e
topology: v5e:2x2
jax: 0.10.0
libtpu: 0.0.40
codegen_flags: <defaults>
</compile_context>

<pallas_src>
import math

import jax
import jax.numpy as jnp
from jax import lax
from jax.experimental import pallas as pl
from jax.experimental.pallas import tpu as pltpu

HEAD = 3


def _graph_learner_kernel(epsilon, num_heads):
    inv_h = 1.0 / float(num_heads)

    def kernel(row_ref, col_ref, w1_ref, w2_ref, out_ref):
        xr = row_ref[0].astype(jnp.float32)       # [TM, D] row block of feats
        xc = col_ref[0].astype(jnp.float32)       # [TN, D] col block of feats
        w1 = w1_ref[...].astype(jnp.float32)      # [H, D]
        w2 = w2_ref[...].astype(jnp.float32)      # [H, D]

        tm = out_ref.shape[1]
        tn = out_ref.shape[2]
        acc = jnp.zeros((tm, tn), jnp.float32)

        # Static unroll over the (small) head axis: big basic block, one feats DMA
        # per (b, i, j) grid point, MXU work interleaved with VPU/EUP normalization.
        for h in range(num_heads):
            c1 = xr * w1[h:h + 1]                 # [TM, D]
            c2 = xc * w2[h:h + 1]                 # [TN, D]

            # F.normalize(p=2, dim=-1, eps=1e-12): x * rsqrt(max(sum(x^2), 1e-24))
            inv1 = lax.rsqrt(jnp.maximum(jnp.sum(c1 * c1, axis=-1, keepdims=True), 1e-24))
            inv2 = lax.rsqrt(jnp.maximum(jnp.sum(c2 * c2, axis=-1, keepdims=True), 1e-24))
            c1n = (c1 * inv1).astype(jnp.bfloat16)
            c2n = (c2 * inv2).astype(jnp.bfloat16)

            # Contract on the shared D axis directly (no transpose), f32 accumulate on MXU.
            acc = acc + lax.dot_general(
                c1n, c2n,
                dimension_numbers=(((1,), (1,)), ((), ())),
                preferred_element_type=jnp.float32,
            )

        avg = acc * inv_h                          # mean over heads (compile-time 1/H)
        out_ref[0] = jnp.where(avg < epsilon, 0.0, avg).astype(out_ref.dtype)

    return kernel


def _pick_tiles(n):
    """Choose (row_tile, col_tile) for the N x N adjacency output."""
    if n <= 512:
        # small graphs: single tile (block == full dims satisfies the (8,128) rule)
        return n, n
    for t in (512, 256, 128):                      # lane-dense, VMEM-safe on v7x (64 MiB)
        if n % t == 0:
            return t, t
    # TODO(synk): pad N to a multiple of 128 for odd sizes; fall back to untiled for now.
    return n, n


def graph_learner_forward(feats, w1, w2, epsilon=0.75):
    """feats: [B, N, D] float32; w1, w2: [HEAD, D]. Returns adjacency [B, N, N]."""
    B, N, D = feats.shape
    H = w1.shape[0]
    TM, TN = _pick_tiles(N)

    grid = (B, N // TM, N // TN)

    # double-buffered inputs + resident output tile + headroom
    vmem_bytes = 2 * 4 * (TM * D + TN * D + 2 * H * D + TM * TN) + (4 << 20)
    vmem_limit = min(max(vmem_bytes, 16 * 1024 * 1024), 96 * 1024 * 1024)

    return pl.pallas_call(
        _graph_learner_kernel(epsilon, H),
        out_shape=jax.ShapeDtypeStruct((B, N, N), jnp.float32),
        grid_spec=pltpu.PrefetchScalarGridSpec(
            num_scalar_prefetch=0,
            grid=grid,
            in_specs=[
                pl.BlockSpec((1, TM, D), lambda b, i, j: (b, i, 0)),  # feats rows
                pl.BlockSpec((1, TN, D), lambda b, i, j: (b, j, 0)),  # feats cols
                pl.BlockSpec((H, D), lambda b, i, j: (0, 0)),         # w1 (all heads)
                pl.BlockSpec((H, D), lambda b, i, j: (0, 0)),         # w2 (all heads)
            ],
            out_specs=pl.BlockSpec((1, TM, TN), lambda b, i, j: (b, i, j)),
        ),
        compiler_params=pltpu.CompilerParams(
            dimension_semantics=("parallel", "parallel", "parallel"),
            vmem_limit_bytes=vmem_limit,
        ),
    )(feats, feats, w1, w2)


def _xavier_uniform(key, shape):
    # torch.nn.init.xavier_uniform_ for a 2D [fan_out, fan_in] tensor
    fan_out, fan_in = shape
    bound = math.sqrt(6.0 / (fan_in + fan_out))
    return jax.random.uniform(key, shape, jnp.float32, minval=-bound, maxval=bound)


def reference_sim(feats, w1, w2):
    # pure-JAX reference of weighted_cos_score (mirrors the PyTorch code, f32)
    ew1 = w1[:, None, None, :]                 # [H,1,1,D]
    ew2 = w2[:, None, None, :]
    c1 = feats[None] * ew1                     # [H,B,N,D]
    c2 = feats[None] * ew2
    c1n = c1 / jnp.maximum(jnp.linalg.norm(c1, axis=-1, keepdims=True), 1e-12)
    c2n = c2 / jnp.maximum(jnp.linalg.norm(c2, axis=-1, keepdims=True), 1e-12)
    return jnp.einsum("hbnd,hbmd->hbnm", c1n, c2n).mean(0)


if __name__ == "__main__":
    key = jax.random.PRNGKey(0)
    k_feats, k_w1, k_w2 = jax.random.split(key, 3)

    B, N, D = 2, 8, 32          # small shapes consistent with feats=[B, N, D]
    epsilon = 0.75

    feats = jax.random.normal(k_feats, (B, N, D), jnp.float32)
    w1 = _xavier_uniform(k_w1, (HEAD, D))
    w2 = _xavier_uniform(k_w2, (HEAD, D))

    out = graph_learner_forward(feats, w1, w2, epsilon)
    out = jax.block_until_ready(out)

    sim = reference_sim(feats, w1, w2)
    ref = jnp.where(sim < epsilon, 0.0, sim)

    assert out.shape == (B, N, N)
    # bf16 MXU operands can flip values sitting right at the epsilon threshold;
    # accept either a close match or a reference value within the bf16 band of epsilon.
    near_thresh = jnp.abs(sim - epsilon) < 3e-2
    ok = jnp.isclose(out, ref, atol=3e-2, rtol=0.0) | near_thresh
    assert bool(jnp.all(ok)), "mismatch vs reference"

    print("KERNEL_OK")
</pallas_src>

<mosaic_0001>
module attributes {stable_mosaic.version = 11 : i64} {
  func.func @kernel(%arg0: i32, %arg1: i32, %arg2: i32, %arg3: memref<1x8x32xf32, #tpu.memory_space<vmem>>, %arg4: memref<1x8x32xf32, #tpu.memory_space<vmem>>, %arg5: memref<3x32xf32, #tpu.memory_space<vmem>>, %arg6: memref<3x32xf32, #tpu.memory_space<vmem>>, %arg7: memref<1x8x8xf32, #tpu.memory_space<vmem>>) attributes {dimension_semantics = [#tpu.dimension_semantics<parallel>, #tpu.dimension_semantics<parallel>, #tpu.dimension_semantics<parallel>], iteration_bounds = array<i64: 2, 1, 1>, scalar_prefetch = 0 : i64, scratch_operands = 0 : i64, tpu.core_type = #tpu.core_type<tc>, window_params = [{transform_indices = @transform_0, window_bounds = array<i64: 1, 8, 32>}, {transform_indices = @transform_1, window_bounds = array<i64: 1, 8, 32>}, {pipeline_mode = #tpu.pipeline_mode<synchronous>, transform_indices = @transform_2, window_bounds = array<i64: 3, 32>}, {pipeline_mode = #tpu.pipeline_mode<synchronous>, transform_indices = @transform_3, window_bounds = array<i64: 3, 32>}, {transform_indices = @transform_4, window_bounds = array<i64: 1, 8, 8>}]} {
    %c0 = arith.constant 0 : index
    %c0_0 = arith.constant 0 : index
    %c0_1 = arith.constant 0 : index
    %0 = vector.load %arg3[%c0, %c0_0, %c0_1] : memref<1x8x32xf32, #tpu.memory_space<vmem>>, vector<1x8x32xf32>
    %1 = vector.shape_cast %0 : vector<1x8x32xf32> to vector<8x32xf32>
    %c0_2 = arith.constant 0 : index
    %c0_3 = arith.constant 0 : index
    %c0_4 = arith.constant 0 : index
    %2 = vector.load %arg4[%c0_2, %c0_3, %c0_4] : memref<1x8x32xf32, #tpu.memory_space<vmem>>, vector<1x8x32xf32>
    %3 = vector.shape_cast %2 : vector<1x8x32xf32> to vector<8x32xf32>
    %c0_5 = arith.constant 0 : index
    %c0_6 = arith.constant 0 : index
    %4 = vector.load %arg5[%c0_5, %c0_6] : memref<3x32xf32, #tpu.memory_space<vmem>>, vector<3x32xf32>
    %c0_7 = arith.constant 0 : index
    %c0_8 = arith.constant 0 : index
    %5 = vector.load %arg6[%c0_7, %c0_8] : memref<3x32xf32, #tpu.memory_space<vmem>>, vector<3x32xf32>
    %cst = arith.constant 0.000000e+00 : f32
    %6 = vector.broadcast %cst : f32 to vector<8x8xf32>
    %7 = vector.extract_strided_slice %4 {offsets = [0, 0], sizes = [1, 32], strides = [1, 1]} : vector<3x32xf32> to vector<1x32xf32>
    %8 = vector.broadcast %7 : vector<1x32xf32> to vector<8x32xf32>
    %9 = arith.mulf %1, %8 : vector<8x32xf32>
    %10 = vector.extract_strided_slice %5 {offsets = [0, 0], sizes = [1, 32], strides = [1, 1]} : vector<3x32xf32> to vector<1x32xf32>
    %11 = vector.broadcast %10 : vector<1x32xf32> to vector<8x32xf32>
    %12 = arith.mulf %3, %11 : vector<8x32xf32>
    %13 = arith.mulf %9, %9 : vector<8x32xf32>
    %cst_9 = arith.constant dense<0.000000e+00> : vector<8xf32>
    %14 = vector.multi_reduction <add>, %13, %cst_9 [1] : vector<8x32xf32> to vector<8xf32>
    %15 = vector.shape_cast %14 : vector<8xf32> to vector<8x1xf32>
    %cst_10 = arith.constant 1.000000e-24 : f32
    %16 = vector.broadcast %cst_10 : f32 to vector<8x1xf32>
    %17 = arith.maximumf %15, %16 : vector<8x1xf32>
    %18 = math.rsqrt %17 : vector<8x1xf32>
    %19 = arith.mulf %12, %12 : vector<8x32xf32>
    %cst_11 = arith.constant dense<0.000000e+00> : vector<8xf32>
    %20 = vector.multi_reduction <add>, %19, %cst_11 [1] : vector<8x32xf32> to vector<8xf32>
    %21 = vector.shape_cast %20 : vector<8xf32> to vector<8x1xf32>
    %cst_12 = arith.constant 1.000000e-24 : f32
    %22 = vector.broadcast %cst_12 : f32 to vector<8x1xf32>
    %23 = arith.maximumf %21, %22 : vector<8x1xf32>
    %24 = math.rsqrt %23 : vector<8x1xf32>
    %25 = vector.broadcast %18 : vector<8x1xf32> to vector<8x32xf32>
    %26 = arith.mulf %9, %25 : vector<8x32xf32>
    %27 = arith.truncf %26 : vector<8x32xf32> to vector<8x32xbf16>
    %28 = vector.broadcast %24 : vector<8x1xf32> to vector<8x32xf32>
    %29 = arith.mulf %12, %28 : vector<8x32xf32>
    %30 = arith.truncf %29 : vector<8x32xf32> to vector<8x32xbf16>
    %cst_13 = arith.constant dense<0.000000e+00> : vector<8x8xf32>
    %31 = tpu.matmul %27, %30, %cst_13 {dimension_numbers = #tpu.dot_dimension_numbers<[1], [1], [0], [0], [0, 0, 1, 0], [], []>} : vector<8x32xbf16>, vector<8x32xbf16>, vector<8x8xf32> -> vector<8x8xf32>
    %32 = arith.addf %6, %31 : vector<8x8xf32>
    %33 = vector.extract_strided_slice %4 {offsets = [1, 0], sizes = [1, 32], strides = [1, 1]} : vector<3x32xf32> to vector<1x32xf32>
    %34 = vector.broadcast %33 : vector<1x32xf32> to vector<8x32xf32>
    %35 = arith.mulf %1, %34 : vector<8x32xf32>
    %36 = vector.extract_strided_slice %5 {offsets = [1, 0], sizes = [1, 32], strides = [1, 1]} : vector<3x32xf32> to vector<1x32xf32>
    %37 = vector.broadcast %36 : vector<1x32xf32> to vector<8x32xf32>
    %38 = arith.mulf %3, %37 : vector<8x32xf32>
    %39 = arith.mulf %35, %35 : vector<8x32xf32>
    %cst_14 = arith.constant dense<0.000000e+00> : vector<8xf32>
    %40 = vector.multi_reduction <add>, %39, %cst_14 [1] : vector<8x32xf32> to vector<8xf32>
    %41 = vector.shape_cast %40 : vector<8xf32> to vector<8x1xf32>
    %cst_15 = arith.constant 1.000000e-24 : f32
    %42 = vector.broadcast %cst_15 : f32 to vector<8x1xf32>
    %43 = arith.maximumf %41, %42 : vector<8x1xf32>
    %44 = math.rsqrt %43 : vector<8x1xf32>
    %45 = arith.mulf %38, %38 : vector<8x32xf32>
    %cst_16 = arith.constant dense<0.000000e+00> : vector<8xf32>
    %46 = vector.multi_reduction <add>, %45, %cst_16 [1] : vector<8x32xf32> to vector<8xf32>
    %47 = vector.shape_cast %46 : vector<8xf32> to vector<8x1xf32>
    %cst_17 = arith.constant 1.000000e-24 : f32
    %48 = vector.broadcast %cst_17 : f32 to vector<8x1xf32>
    %49 = arith.maximumf %47, %48 : vector<8x1xf32>
    %50 = math.rsqrt %49 : vector<8x1xf32>
    %51 = vector.broadcast %44 : vector<8x1xf32> to vector<8x32xf32>
    %52 = arith.mulf %35, %51 : vector<8x32xf32>
    %53 = arith.truncf %52 : vector<8x32xf32> to vector<8x32xbf16>
    %54 = vector.broadcast %50 : vector<8x1xf32> to vector<8x32xf32>
    %55 = arith.mulf %38, %54 : vector<8x32xf32>
    %56 = arith.truncf %55 : vector<8x32xf32> to vector<8x32xbf16>
    %cst_18 = arith.constant dense<0.000000e+00> : vector<8x8xf32>
    %57 = tpu.matmul %53, %56, %cst_18 {dimension_numbers = #tpu.dot_dimension_numbers<[1], [1], [0], [0], [0, 0, 1, 0], [], []>} : vector<8x32xbf16>, vector<8x32xbf16>, vector<8x8xf32> -> vector<8x8xf32>
    %58 = arith.addf %32, %57 : vector<8x8xf32>
    %59 = vector.extract_strided_slice %4 {offsets = [2, 0], sizes = [1, 32], strides = [1, 1]} : vector<3x32xf32> to vector<1x32xf32>
    %60 = vector.broadcast %59 : vector<1x32xf32> to vector<8x32xf32>
    %61 = arith.mulf %1, %60 : vector<8x32xf32>
    %62 = vector.extract_strided_slice %5 {offsets = [2, 0], sizes = [1, 32], strides = [1, 1]} : vector<3x32xf32> to vector<1x32xf32>
    %63 = vector.broadcast %62 : vector<1x32xf32> to vector<8x32xf32>
    %64 = arith.mulf %3, %63 : vector<8x32xf32>
    %65 = arith.mulf %61, %61 : vector<8x32xf32>
    %cst_19 = arith.constant dense<0.000000e+00> : vector<8xf32>
    %66 = vector.multi_reduction <add>, %65, %cst_19 [1] : vector<8x32xf32> to vector<8xf32>
    %67 = vector.shape_cast %66 : vector<8xf32> to vector<8x1xf32>
    %cst_20 = arith.constant 1.000000e-24 : f32
    %68 = vector.broadcast %cst_20 : f32 to vector<8x1xf32>
    %69 = arith.maximumf %67, %68 : vector<8x1xf32>
    %70 = math.rsqrt %69 : vector<8x1xf32>
    %71 = arith.mulf %64, %64 : vector<8x32xf32>
    %cst_21 = arith.constant dense<0.000000e+00> : vector<8xf32>
    %72 = vector.multi_reduction <add>, %71, %cst_21 [1] : vector<8x32xf32> to vector<8xf32>
    %73 = vector.shape_cast %72 : vector<8xf32> to vector<8x1xf32>
    %cst_22 = arith.constant 1.000000e-24 : f32
    %74 = vector.broadcast %cst_22 : f32 to vector<8x1xf32>
    %75 = arith.maximumf %73, %74 : vector<8x1xf32>
    %76 = math.rsqrt %75 : vector<8x1xf32>
    %77 = vector.broadcast %70 : vector<8x1xf32> to vector<8x32xf32>
    %78 = arith.mulf %61, %77 : vector<8x32xf32>
    %79 = arith.truncf %78 : vector<8x32xf32> to vector<8x32xbf16>
    %80 = vector.broadcast %76 : vector<8x1xf32> to vector<8x32xf32>
    %81 = arith.mulf %64, %80 : vector<8x32xf32>
    %82 = arith.truncf %81 : vector<8x32xf32> to vector<8x32xbf16>
    %cst_23 = arith.constant dense<0.000000e+00> : vector<8x8xf32>
    %83 = tpu.matmul %79, %82, %cst_23 {dimension_numbers = #tpu.dot_dimension_numbers<[1], [1], [0], [0], [0, 0, 1, 0], [], []>} : vector<8x32xbf16>, vector<8x32xbf16>, vector<8x8xf32> -> vector<8x8xf32>
    %84 = arith.addf %58, %83 : vector<8x8xf32>
    %cst_24 = arith.constant 0.333333343 : f32
    %85 = vector.broadcast %cst_24 : f32 to vector<8x8xf32>
    %86 = arith.mulf %84, %85 : vector<8x8xf32>
    %cst_25 = arith.constant 7.500000e-01 : f32
    %87 = vector.broadcast %cst_25 : f32 to vector<8x8xf32>
    %88 = arith.cmpf olt, %86, %87 : vector<8x8xf32>
    %cst_26 = arith.constant 0.000000e+00 : f32
    %89 = vector.broadcast %cst_26 : f32 to vector<8x8xf32>
    %90 = arith.select %88, %89, %86 : vector<8x8xi1>, vector<8x8xf32>
    %c0_27 = arith.constant 0 : index
    %c0_28 = arith.constant 0 : index
    %c0_29 = arith.constant 0 : index
    %91 = vector.load %arg7[%c0_27, %c0_28, %c0_29] : memref<1x8x8xf32, #tpu.memory_space<vmem>>, vector<1x8x8xf32>
    %92 = vector.shape_cast %91 : vector<1x8x8xf32> to vector<8x8xf32>
    %93 = vector.shape_cast %90 : vector<8x8xf32> to vector<1x8x8xf32>
    tpu.vector_store %arg7[%c0_27, %c0_28, %c0_29], %93 {strides = array<i32>} : memref<1x8x8xf32, #tpu.memory_space<vmem>>, vector<1x8x8xf32>,
    return
  }
  func.func @transform_0(%arg0: i32, %arg1: i32, %arg2: i32) -> (i32, i32, i32) {
    %c0_i32 = arith.constant 0 : i32
    %c0_i32_0 = arith.constant 0 : i32
    return %arg0, %arg1, %c0_i32 : i32, i32, i32
  }
  func.func @transform_1(%arg0: i32, %arg1: i32, %arg2: i32) -> (i32, i32, i32) {
    %c0_i32 = arith.constant 0 : i32
    %c0_i32_0 = arith.constant 0 : i32
    return %arg0, %arg2, %c0_i32 : i32, i32, i32
  }
  func.func @transform_2(%arg0: i32, %arg1: i32, %arg2: i32) -> (i32, i32) {
    %c0_i32 = arith.constant 0 : i32
    %c0_i32_0 = arith.constant 0 : i32
    %c0_i32_1 = arith.constant 0 : i32
    return %c0_i32, %c0_i32_0 : i32, i32
  }
  func.func @transform_3(%arg0: i32, %arg1: i32, %arg2: i32) -> (i32, i32) {
    %c0_i32 = arith.constant 0 : i32
    %c0_i32_0 = arith.constant 0 : i32
    %c0_i32_1 = arith.constant 0 : i32
    return %c0_i32, %c0_i32_0 : i32, i32
  }
  func.func @transform_4(%arg0: i32, %arg1: i32, %arg2: i32) -> (i32, i32, i32) {
    %c0_i32 = arith.constant 0 : i32
    return %arg0, %arg1, %arg2 : i32, i32, i32
  }
}

</mosaic_0001>

<llo_original>
// kernel: tpu_custom_call.1
$region0: #{tpu_custom_call.1}
  #allocation0 [shape = 'u32[]', space=smem, size = 0x4, offset = 0x4, fixed_abs, tag = 'smem constant byte address 0x4 - core index']
  #allocation1 [shape = 'u32[72,128]{1,0:T(1,128)}', space=vmem, size = 0x9000, scoped, tag = 'internal scratch']
  %s0 = inlined_call_operand.hbm [shape: f32[2,8,32], index: 0, kind: input, shape index: {}]
  %s1 = inlined_call_operand.hbm [shape: f32[2,8,32], index: 1, kind: input, shape index: {}]
  %s2 = inlined_call_operand.hbm [shape: f32[3,32], index: 2, kind: input, shape index: {}]
  %s3 = inlined_call_operand.hbm [shape: f32[3,32], index: 3, kind: input, shape index: {}]
  %s4 = inlined_call_operand.hbm [shape: f32[2,8,8], index: 4, kind: output, shape index: {}]
  %s5 = sld [smem:[#allocation0]]
  $region65: #{tpu_custom_call.1} parent=0
    _
  %s7 = ssub.s32 1, %s5
  %s8 = scalar_select 0, %s7, %s5
  $region1: #{tpu_custom_call.1} parent=0
    #allocation2 [shape = 'u8[8192]{0}', space=vmem, size = 0x2000, scoped, tag = 'input window, operand 0']
    #allocation3 [shape = 's32[2]{0}', space=sflag, size = 0x8, scoped, tag = 'scoped memory for tpu_custom_call.1']
    #allocation4 [shape = 's32[2]{0}', space=sflag, size = 0x8, scoped, tag = 'scoped memory for tpu_custom_call.1']
    #allocation5 [shape = 'u8[8192]{0}', space=vmem, size = 0x2000, scoped, tag = 'input window, operand 1']
    #allocation6 [shape = 's32[2]{0}', space=sflag, size = 0x8, scoped, tag = 'scoped memory for tpu_custom_call.1']
    #allocation7 [shape = 'u8[2048]{0}', space=vmem, size = 0x800, scoped, tag = 'input window, operand 2, single buffered']
    #allocation8 [shape = 'u8[2048]{0}', space=vmem, size = 0x800, scoped, tag = 'input window, operand 3, single buffered']
    #allocation9 [shape = 's32[1]{0}', space=sflag, size = 0x4, scoped, tag = 'scoped memory for tpu_custom_call.1']
    #allocation10 [shape = 'u8[8192]{0}', space=vmem, size = 0x2000, scoped, tag = 'output window, operand 0']
    %9 = vsyncpa [#allocation3], 0
    %s10 = scalar_lea.sflag [#allocation3], 1
    %11 = vsyncpa %s10, 0
    %12 = vsyncpa [#allocation6], 0
    %s13 = scalar_lea.sflag [#allocation6], 1
    %14 = vsyncpa %s13, 0
    %15 = vsyncpa [#allocation9], 0
    %16 = vsyncpa [#allocation4], 0
    %s17 = scalar_lea.sflag [#allocation4], 1
    %18 = vsyncpa %s17, 0
    loop: start=0, step=1, limit=4
    $region2: #{tpu_custom_call.1} parent=1 // loop_pre_header
      _
    $region3: #{tpu_custom_call.1} parent=1 // loop_header
      %s20 = sphi 0, %s24
      %p21 = scmp.ge.s32.totalorder %s20, 4
      %s27 = sphi 0, %s46
      %s28 = sphi 0, %s42
      %s29 = sphi 0, %s38
      %s30 = sphi 0, %s27
      %s31 = sphi 0, %s28
      %s32 = sphi 0, %s29
      %s33 = sphi 0, %s30
      %s34 = sphi 0, %s31
      %s35 = sphi 0, %s32
      %s51 = sphi 0, %s53
      %s54 = sphi 0, %s51
      %s55 = sphi 0, %s54
      %s71 = sphi 0, %s55
      %s79 = sphi 0, %s81
      %s82 = sphi 0, %s79
      %s83 = sphi 0, %s82
      %s99 = sphi 0, %s83
      %s103 = sphi 0, %s103
      %s105 = sphi 0, %s103
      %s106 = sphi 0, %s105
      %s120 = sphi 0, %s106
      %s124 = sphi 0, %s124
      %s126 = sphi 0, %s124
      %s127 = sphi 0, %s126
      %s141 = sphi 0, %s127
      %s151 = sphi 0, %s153
      %s154 = sphi 0, %s151
      %s155 = sphi 0, %s154
      %s171 = sphi 0, %s155
    $region4: #{tpu_custom_call.1} parent=1 // loop_header_branch
      %23 = sbr.rel (%p21) target = $region8
    $region5: #{tpu_custom_call.1} parent=1 // loop_body
      %s25 = ssub.s32 %s20, 1
      %s26 = ssub.s32 %s20, 2
      %s36 = sadd.s32 1, %s29
      %p37 = scmp.ge.s32.totalorder %s36, 1
      %s38 = scalar_select %p37, 0, %s36
      %s39 = sadd.s32 1, %s28
      %s40 = scalar_select %p37, %s39, %s28
      %p41 = scmp.ge.s32.totalorder %s40, 1
      %s42 = scalar_select %p41, 0, %s40
      %s43 = sadd.s32 1, %s27
      %s44 = scalar_select %p41, %s43, %s27
      %p45 = scmp.ge.s32.totalorder %s44, 2
      %s46 = scalar_select %p45, 0, %s44
      %s47 = ssub.s32 %s27, %s46
      %s48 = ssub.s32 %s28, %s42
      %s49 = sor.u32 %s47, %s48
      %p50 = scmp.eq.s32.totalorder %s49, 0
      %s52 = sadd.s32 %s51, 1
      %s53 = scalar_select %p50, %s51, %s52
      %p56 = pneg %p50
      %p57 = scmp.eq.s32.totalorder %s20, 1
      %p58 = por %p56, %p57
      %p59 = scmp.ne.s32.totalorder %s51, %s54
      %p60 = scmp.eq.s32.totalorder %s20, 0
      %p61 = por %p59, %p60
      %p62 = scmp.ne.s32.totalorder %s51, %s54
      %p63 = scmp.eq.s32.totalorder %s25, 1
      %p64 = por %p62, %p63
      %p65 = scmp.ne.s32.totalorder %s54, %s55
      %p66 = scmp.eq.s32.totalorder %s25, 0
      %p67 = por %p65, %p66
      %p68 = scmp.ne.s32.totalorder %s54, %s55
      %p69 = scmp.eq.s32.totalorder %s26, 1
      %p70 = por %p68, %p69
      %p72 = scmp.ne.s32.totalorder %s55, %s71
      %p73 = scmp.eq.s32.totalorder %s26, 0
      %p74 = por %p72, %p73
      %s75 = ssub.s32 %s27, %s46
      %s76 = ssub.s32 %s29, %s38
      %s77 = sor.u32 %s75, %s76
      %p78 = scmp.eq.s32.totalorder %s77, 0
      %s80 = sadd.s32 %s79, 1
      %s81 = scalar_select %p78, %s79, %s80
      %p84 = pneg %p78
      %p85 = scmp.eq.s32.totalorder %s20, 1
      %p86 = por %p84, %p85
      %p87 = scmp.ne.s32.totalorder %s79, %s82
      %p88 = scmp.eq.s32.totalorder %s20, 0
      %p89 = por %p87, %p88
      %p90 = scmp.ne.s32.totalorder %s79, %s82
      %p91 = scmp.eq.s32.totalorder %s25, 1
      %p92 = por %p90, %p91
      %p93 = scmp.ne.s32.totalorder %s82, %s83
      %p94 = scmp.eq.s32.totalorder %s25, 0
      %p95 = por %p93, %p94
      %p96 = scmp.ne.s32.totalorder %s82, %s83
      %p97 = scmp.eq.s32.totalorder %s26, 1
      %p98 = por %p96, %p97
      %p100 = scmp.ne.s32.totalorder %s83, %s99
      %p101 = scmp.eq.s32.totalorder %s26, 0
      %p102 = por %p100, %p101
      %s104 = sadd.s32 %s103, 1
      %p107 = scmp.eq.s32.totalorder %s20, 1
      %p108 = scmp.ne.s32.totalorder %s103, %s105
      %p109 = scmp.eq.s32.totalorder %s20, 0
      %p110 = por %p108, %p109
      %p111 = scmp.ne.s32.totalorder %s103, %s105
      %p112 = scmp.eq.s32.totalorder %s25, 1
      %p113 = por %p111, %p112
      %p114 = scmp.ne.s32.totalorder %s105, %s106
      %p115 = scmp.eq.s32.totalorder %s25, 0
      %p116 = por %p114, %p115
      %p117 = scmp.ne.s32.totalorder %s105, %s106
      %p118 = scmp.eq.s32.totalorder %s26, 1
      %p119 = por %p117, %p118
      %p121 = scmp.ne.s32.totalorder %s106, %s120
      %p122 = scmp.eq.s32.totalorder %s26, 0
      %p123 = por %p121, %p122
      %s125 = sadd.s32 %s124, 1
      %p128 = scmp.eq.s32.totalorder %s20, 1
      %p129 = scmp.ne.s32.totalorder %s124, %s126
      %p130 = scmp.eq.s32.totalorder %s20, 0
      %p131 = por %p129, %p130
      %p132 = scmp.ne.s32.totalorder %s124, %s126
      %p133 = scmp.eq.s32.totalorder %s25, 1
      %p134 = por %p132, %p133
      %p135 = scmp.ne.s32.totalorder %s126, %s127
      %p136 = scmp.eq.s32.totalorder %s25, 0
      %p137 = por %p135, %p136
      %p138 = scmp.ne.s32.totalorder %s126, %s127
      %p139 = scmp.eq.s32.totalorder %s26, 1
      %p140 = por %p138, %p139
      %p142 = scmp.ne.s32.totalorder %s127, %s141
      %p143 = scmp.eq.s32.totalorder %s26, 0
      %p144 = por %p142, %p143
      %s145 = ssub.s32 %s27, %s46
      %s146 = ssub.s32 %s28, %s42
      %s147 = sor.u32 %s145, %s146
      %s148 = ssub.s32 %s29, %s38
      %s149 = sor.u32 %s147, %s148
      %p150 = scmp.eq.s32.totalorder %s149, 0
      %s152 = sadd.s32 %s151, 1
      %s153 = scalar_select %p150, %s151, %s152
      %p156 = pneg %p150
      %p157 = scmp.eq.s32.totalorder %s20, 1
      %p158 = por %p156, %p157
      %p159 = scmp.ne.s32.totalorder %s151, %s154
      %p160 = scmp.eq.s32.totalorder %s20, 0
      %p161 = por %p159, %p160
      %p162 = scmp.ne.s32.totalorder %s151, %s154
      %p163 = scmp.eq.s32.totalorder %s25, 1
      %p164 = por %p162, %p163
      %p165 = scmp.ne.s32.totalorder %s154, %s155
      %p166 = scmp.eq.s32.totalorder %s25, 0
      %p167 = por %p165, %p166
      %p168 = scmp.ne.s32.totalorder %s154, %s155
      %p169 = scmp.eq.s32.totalorder %s26, 1
      %p170 = por %p168, %p169
      %p172 = scmp.ne.s32.totalorder %s155, %s171
      %p173 = scmp.eq.s32.totalorder %s26, 0
      %p174 = por %p172, %p173
      %p175 = scmp.le.s32.totalorder 1, %s20
      %p176 = scmp.lt.s32.totalorder %s20, 3
      %p177 = pnand %p175, %p176
      %p178 = pneg %p177
      // Predicated region
      $region9: #{tpu_custom_call.1} parent=5 // pred_check
        _
      $region10: #{tpu_custom_call.1} parent=5 // pred_check_branch
        %180 = sbr.rel (%p177) target = $region12
      $region11: #{tpu_custom_call.1} parent=5 // pred_region
        %s181 = ssub.s32 %s20, 1
        // Predicated region
        $region13: #{tpu_custom_call.1} parent=11 // pred_check
          %p182 = pneg %p116
        $region14: #{tpu_custom_call.1} parent=11 // pred_check_branch
          %184 = sbr.rel (%p182) target = $region16
        $region15: #{tpu_custom_call.1} parent=11 // pred_region
          %186 = vsyncadd [#allocation6], 0
          %s188 = sshll.u32 %s2, 4
          %s189 = int_to_ptr.hbm [resolvable:$true] %s188
          %s190 = sshll.u32 [#allocation7], 4
          %s191 = int_to_ptr.vmem [resolvable:$true] %s190
          %193 = dma.hbm_to_vmem [thread:$0]  %s189, 64, %s191, [#allocation6]
        $region16: #{tpu_custom_call.1} parent=11 // pred_fallthru
          _
        // Predicated region
        $region17: #{tpu_custom_call.1} parent=11 // pred_check
          %p194 = pneg %p137
        $region18: #{tpu_custom_call.1} parent=11 // pred_check_branch
          %196 = sbr.rel (%p194) target = $region20
        $region19: #{tpu_custom_call.1} parent=11 // pred_region
          %198 = vsyncadd [#allocation9], 0
          %s200 = sshll.u32 %s3, 4
          %s201 = int_to_ptr.hbm [resolvable:$true] %s200
          %s202 = sshll.u32 [#allocation8], 4
          %s203 = int_to_ptr.vmem [resolvable:$true] %s202
          %205 = dma.hbm_to_vmem [thread:$0]  %s201, 64, %s203, [#allocation9]
        $region20: #{tpu_custom_call.1} parent=11 // pred_fallthru
          _
      $region12: #{tpu_custom_call.1} parent=5 // pred_fallthru
        _
      %p206 = scmp.lt.s32.totalorder %s20, 2
      // Predicated region
      $region21: #{tpu_custom_call.1} parent=5 // pred_check
        %p207 = pneg %p206
      $region22: #{tpu_custom_call.1} parent=5 // pred_check_branch
        %209 = sbr.rel (%p207) target = $region24
      $region23: #{tpu_custom_call.1} parent=5 // pred_region
        // Predicated region
        $region25: #{tpu_custom_call.1} parent=23 // pred_check
          %p210 = pneg %p61
        $region26: #{tpu_custom_call.1} parent=23 // pred_check_branch
          %212 = sbr.rel (%p210) target = $region28
        $region27: #{tpu_custom_call.1} parent=23 // pred_region
          %s213 = sand.u32 %s51, 1
          %s214 = scalar_lea.sflag [#allocation3], %s213
          %s215 = sand.u32 %s51, 1
          %s216 = smul.addr %s215, 8
          %s217 = scalar_lea.vmem [#allocation2], %s216
          %219 = vsyncadd %s214, 0
          %s220 = sadd.s32 %s28, %s27
          %s221 = smul.addr %s220, 8
          %s222 = scalar_lea.hbm %s0, %s221
          %s224 = sshll.u32 %s222, 4
          %s225 = int_to_ptr.hbm [resolvable:$true] %s224
          %s226 = sshll.u32 %s217, 4
          %s227 = int_to_ptr.vmem [resolvable:$true] %s226
          %229 = dma.hbm_to_vmem [thread:$0]  %s225, 128, %s227, %s214
        $region28: #{tpu_custom_call.1} parent=23 // pred_fallthru
          _
        // Predicated region
        $region29: #{tpu_custom_call.1} parent=23 // pred_check
          %p230 = pneg %p89
        $region30: #{tpu_custom_call.1} parent=23 // pred_check_branch
          %232 = sbr.rel (%p230) target = $region32
        $region31: #{tpu_custom_call.1} parent=23 // pred_region
          %s233 = sand.u32 %s20, 1
          %s234 = scalar_lea.sflag [#allocation6], %s233
          %s235 = sand.u32 %s79, 1
          %s236 = smul.addr %s235, 8
          %s237 = scalar_lea.vmem [#allocation5], %s236
          %239 = vsyncadd %s234, 0
          %s240 = sadd.s32 %s29, %s27
          %s241 = smul.addr %s240, 8
          %s242 = scalar_lea.hbm %s1, %s241
          %s244 = sshll.u32 %s242, 4
          %s245 = int_to_ptr.hbm [resolvable:$true] %s244
          %s246 = sshll.u32 %s237, 4
          %s247 = int_to_ptr.vmem [resolvable:$true] %s246
          %249 = dma.hbm_to_vmem [thread:$0]  %s245, 128, %s247, %s234
        $region32: #{tpu_custom_call.1} parent=23 // pred_fallthru
          _
      $region24: #{tpu_custom_call.1} parent=5 // pred_fallthru
        _
      %p250 = scmp.le.s32.totalorder 1, %s20
      %p251 = scmp.lt.s32.totalorder %s20, 3
      %p252 = pnand %p250, %p251
      %p253 = pneg %p252
      // Predicated region
      $region33: #{tpu_custom_call.1} parent=5 // pred_check
        _
      $region34: #{tpu_custom_call.1} parent=5 // pred_check_branch
        %255 = sbr.rel (%p252) target = $region36
      $region35: #{tpu_custom_call.1} parent=5 // pred_region
        %s256 = ssub.s32 %s20, 1
        %s257 = sand.u32 %s54, 1
        %s258 = scalar_lea.sflag [#allocation3], %s257
        %s259 = sand.u32 %s54, 1
        %s260 = smul.addr %s259, 8
        %s261 = scalar_lea.vmem [#allocation2], %s260
        // Predicated region
        $region37: #{tpu_custom_call.1} parent=35 // pred_check
          %p262 = pneg %p67
        $region38: #{tpu_custom_call.1} parent=35 // pred_check_branch
          %264 = sbr.rel (%p262) target = $region40
        $region39: #{tpu_custom_call.1} parent=35 // pred_region
          %266 = dma.done %s258, 128
        $region40: #{tpu_custom_call.1} parent=35 // pred_fallthru
          _
        %s267 = sand.u32 %s25, 1
        %s268 = scalar_lea.sflag [#allocation6], %s267
        %s269 = sand.u32 %s82, 1
        %s270 = smul.addr %s269, 8
        %s271 = scalar_lea.vmem [#allocation5], %s270
        // Predicated region
        $region41: #{tpu_custom_call.1} parent=35 // pred_check
          %p272 = pneg %p95
        $region42: #{tpu_custom_call.1} parent=35 // pred_check_branch
          %274 = sbr.rel (%p272) target = $region44
        $region43: #{tpu_custom_call.1} parent=35 // pred_region
          %276 = dma.done %s268, 128
        $region44: #{tpu_custom_call.1} parent=35 // pred_fallthru
          _
        // Predicated region
        $region45: #{tpu_custom_call.1} parent=35 // pred_check
          %p277 = pneg %p116
        $region46: #{tpu_custom_call.1} parent=35 // pred_check_branch
          %279 = sbr.rel (%p277) target = $region48
        $region47: #{tpu_custom_call.1} parent=35 // pred_region
          %281 = dma.done [#allocation6], 64
        $region48: #{tpu_custom_call.1} parent=35 // pred_fallthru
          _
        // Predicated region
        $region49: #{tpu_custom_call.1} parent=35 // pred_check
          %p282 = pneg %p137
        $region50: #{tpu_custom_call.1} parent=35 // pred_check_branch
          %284 = sbr.rel (%p282) target = $region52
        $region51: #{tpu_custom_call.1} parent=35 // pred_region
          %286 = dma.done [#allocation9], 64
        $region52: #{tpu_custom_call.1} parent=35 // pred_fallthru
          _
        %s287 = sand.u32 %s54, 1
        %s288 = scalar_lea.sflag [#allocation3], %s287
        %s289 = sand.u32 %s54, 1
        %s290 = smul.addr %s289, 8
        %s291 = scalar_lea.vmem [#allocation2], %s290
        %p292 = pneg %p67
        %p293 = pneg %p64
        %s294 = sand.u32 %s25, 1
        %s295 = scalar_lea.sflag [#allocation6], %s294
        %s296 = sand.u32 %s82, 1
        %s297 = smul.addr %s296, 8
        %s298 = scalar_lea.vmem [#allocation5], %s297
        %p299 = pneg %p95
        %p300 = pneg %p92
        %p301 = pneg %p116
        %p302 = pneg %p113
        %p303 = pneg %p137
        %p304 = pneg %p134
        %p305 = pneg %p167
        %p306 = pneg %p164
        %s307 = sand.u32 %s154, 1
        %s308 = scalar_lea.sflag [#allocation4], %s307
        %s309 = sand.u32 %s154, 1
        %s310 = smul.addr %s309, 8
        %s311 = scalar_lea.vmem [#allocation10], %s310
        %v313 = vld [vmem:[%s261] sm:$0xff]
        %v314 = vld [vmem:[%s271] sm:$0xff]
        %v315 = vld [vmem:[#allocation7] sm:$0x7]
        %v316 = vld [vmem:[#allocation8] sm:$0x7]
        %v317 = vperm.slane %v315, 0
        %v318 = vmul.f32 %v313, %v317
        %v319 = vperm.slane %v316, 0
        %v320 = vmul.f32 %v314, %v319
        %v321 = vmul.f32 %v318, %v318
        %vm322 = vcmask 261120
        %v323 = vsel %vm322, %v321, 0.0
        %324 = vadd.xlane.f32.xlu0 %v323
        %v325 = vpop.xlane.xlu0 %324
        %v326 = vmax.f32 %v325, 1e-24
        %v327 = vrsqrt.pop %v326
        %v328 = vmul.f32 %v327, %v326
        %v329 = vmul.f32 %v328, %v327
        %v330 = vmul.f32 0.5, %v329
        %v331 = vsub.f32 1.5, %v330
        %v332 = vmul.f32 %v327, %v331
        %vm333 = vweird.f32 %v326
        %vm334 = vweird.f32 %v327
        %vm335 = vmor %vm333, %vm334
        %v336 = vsel %vm335, %v327, %v332
        %v337 = vmul.f32 %v320, %v320
        %v338 = vsel %vm322, %v337, 0.0
        %339 = vadd.xlane.f32.xlu0 %v338
        %v340 = vpop.xlane.xlu0 %339
        %v341 = vmax.f32 %v340, 1e-24
        %v342 = vrsqrt.pop %v341
        %v343 = vmul.f32 %v342, %v341
        %v344 = vmul.f32 %v343, %v342
        %v345 = vmul.f32 0.5, %v344
        %v346 = vsub.f32 1.5, %v345
        %v347 = vmul.f32 %v342, %v346
        %vm348 = vweird.f32 %v341
        %vm349 = vweird.f32 %v342
        %vm350 = vmor %vm348, %vm349
        %v351 = vsel %vm350, %v342, %v347
        %v352 = vmul.f32 %v318, %v336
        %v353 = vpack.c.bf16 %v352, %v352
        %v354 = vmul.f32 %v320, %v351
        %v355 = vpack.c.bf16 %v354, %v354
        %v356 = vperm.slane %v315, 1
        %v357 = vmul.f32 %v313, %v356
        %v358 = vperm.slane %v316, 1
        %v359 = vmul.f32 %v314, %v358
        %v360 = vmul.f32 %v357, %v357
        %v361 = vsel %vm322, %v360, 0.0
        %362 = vadd.xlane.f32.xlu0 %v361
        %v363 = vpop.xlane.xlu0 %362
        %v364 = vmax.f32 %v363, 1e-24
        %v365 = vrsqrt.pop %v364
        %v366 = vmul.f32 %v365, %v364
        %v367 = vmul.f32 %v366, %v365
        %v368 = vmul.f32 0.5, %v367
        %v369 = vsub.f32 1.5, %v368
        %v370 = vmul.f32 %v365, %v369
        %vm371 = vweird.f32 %v364
        %vm372 = vweird.f32 %v365
        %vm373 = vmor %vm371, %vm372
        %v374 = vsel %vm373, %v365, %v370
        %v375 = vmul.f32 %v359, %v359
        %v376 = vsel %vm322, %v375, 0.0
        %377 = vadd.xlane.f32.xlu0 %v376
        %v378 = vpop.xlane.xlu0 %377
        %v379 = vmax.f32 %v378, 1e-24
        %v380 = vrsqrt.pop %v379
        %v381 = vmul.f32 %v380, %v379
        %v382 = vmul.f32 %v381, %v380
        %v383 = vmul.f32 0.5, %v382
        %v384 = vsub.f32 1.5, %v383
        %v385 = vmul.f32 %v380, %v384
        %vm386 = vweird.f32 %v379
        %vm387 = vweird.f32 %v380
        %vm388 = vmor %vm386, %vm387
        %v389 = vsel %vm388, %v380, %v385
        %v390 = vmul.f32 %v357, %v374
        %v391 = vpack.c.bf16 %v390, %v390
        %v392 = vmul.f32 %v359, %v389
        %v393 = vpack.c.bf16 %v392, %v392
        %v395 = vsel %vm322, %v391, 0
        %v398 = vsel %vm322, %v393, 0
        %400 = vmatpush.bf16.xpose.msra.mxu0 0
        %401 = vmatpush.bf16.xpose.msra.mxu0 0
        %402 = vmatpush.bf16.xpose.msra.mxu0 0
        %403 = vmatpush.bf16.xpose.msra.mxu0 0
        %404 = vmatpush.bf16.xpose.msra.mxu0 0
        %405 = vmatpush.bf16.xpose.msra.mxu0 0
        %406 = vmatpush.bf16.xpose.msra.mxu0 0
        %407 = vmatpush.bf16.xpose.msra.mxu0 %v398
        %408 = vmatmul.bf16.gmra.mxu0 %v395
        %v409 = vpop.f32.mrf.mxu0
        %v410 = vadd.f32 0.0, %v409
        %v411 = vpop.f32.mrf.mxu0
        %412 = vdwg.mxu0
        %v414 = vsel %vm322, %v353, 0
        %v417 = vsel %vm322, %v355, 0
        %419 = vmatpush.bf16.xpose.msra.mxu0 0
        %420 = vmatpush.bf16.xpose.msra.mxu0 0
        %421 = vmatpush.bf16.xpose.msra.mxu0 0
        %422 = vmatpush.bf16.xpose.msra.mxu0 0
        %423 = vmatpush.bf16.xpose.msra.mxu0 0
        %424 = vmatpush.bf16.xpose.msra.mxu0 0
        %425 = vmatpush.bf16.xpose.msra.mxu0 0
        %426 = vmatpush.bf16.xpose.msra.mxu0 %v417
        %427 = vmatmul.bf16.gmra.mxu0 %v414
        %v428 = vpop.f32.mrf.mxu0
        %v429 = vadd.f32 %v410, %v428
        %v430 = vpop.f32.mrf.mxu0
        %431 = vdwg.mxu0
        %v432 = vperm.slane %v315, 2
        %v433 = vmul.f32 %v313, %v432
        %v434 = vperm.slane %v316, 2
        %v435 = vmul.f32 %v314, %v434
        %v436 = vmul.f32 %v433, %v433
        %v437 = vsel %vm322, %v436, 0.0
        %438 = vadd.xlane.f32.xlu0 %v437
        %v439 = vpop.xlane.xlu0 %438
        %v440 = vmax.f32 %v439, 1e-24
        %v441 = vrsqrt.pop %v440
        %v442 = vmul.f32 %v441, %v440
        %v443 = vmul.f32 %v442, %v441
        %v444 = vmul.f32 0.5, %v443
        %v445 = vsub.f32 1.5, %v444
        %v446 = vmul.f32 %v441, %v445
        %vm447 = vweird.f32 %v440
        %vm448 = vweird.f32 %v441
        %vm449 = vmor %vm447, %vm448
        %v450 = vsel %vm449, %v441, %v446
        %v451 = vmul.f32 %v435, %v435
        %v452 = vsel %vm322, %v451, 0.0
        %453 = vadd.xlane.f32.xlu0 %v452
        %v454 = vpop.xlane.xlu0 %453
        %v455 = vmax.f32 %v454, 1e-24
        %v456 = vrsqrt.pop %v455
        %v457 = vmul.f32 %v456, %v455
        %v458 = vmul.f32 %v457, %v456
        %v459 = vmul.f32 0.5, %v458
        %v460 = vsub.f32 1.5, %v459
        %v461 = vmul.f32 %v456, %v460
        %vm462 = vweird.f32 %v455
        %vm463 = vweird.f32 %v456
        %vm464 = vmor %vm462, %vm463
        %v465 = vsel %vm464, %v456, %v461
        %v466 = vmul.f32 %v433, %v450
        %v467 = vpack.c.bf16 %v466, %v466
        %v468 = vmul.f32 %v435, %v465
        %v469 = vpack.c.bf16 %v468, %v468
        %v471 = vsel %vm322, %v467, 0
        %v474 = vsel %vm322, %v469, 0
        %476 = vmatpush.bf16.xpose.msra.mxu0 0
        %477 = vmatpush.bf16.xpose.msra.mxu0 0
        %478 = vmatpush.bf16.xpose.msra.mxu0 0
        %479 = vmatpush.bf16.xpose.msra.mxu0 0
        %480 = vmatpush.bf16.xpose.msra.mxu0 0
        %481 = vmatpush.bf16.xpose.msra.mxu0 0
        %482 = vmatpush.bf16.xpose.msra.mxu0 0
        %483 = vmatpush.bf16.xpose.msra.mxu0 %v474
        %484 = vmatmul.bf16.gmra.mxu0 %v471
        %v485 = vpop.f32.mrf.mxu0
        %v486 = vadd.f32 0.0, %v485
        %v487 = vpop.f32.mrf.mxu0
        %488 = vdwg.mxu0
        %v489 = vadd.f32 %v429, %v486
        %v490 = vmul.f32 %v489, 0.33333334
        %vm491 = vcmp.lt.f32.partialorder %v490, 0.75
        %v492 = vsel %vm491, 0.0, %v490
        %vm493 = vcmask 64512
        %494 = vst.msk [vmem:[%s311] sm:$0xff] %vm493, %v492
        %s495 = sand.u32 %s154, 1
        %s496 = scalar_lea.sflag [#allocation4], %s495
        %s497 = sand.u32 %s154, 1
        %s498 = smul.addr %s497, 8
        %s499 = scalar_lea.vmem [#allocation10], %s498
        // Predicated region
        $region53: #{tpu_custom_call.1} parent=35 // pred_check
          %p500 = pneg %p164
        $region54: #{tpu_custom_call.1} parent=35 // pred_check_branch
          %502 = sbr.rel (%p500) target = $region56
        $region55: #{tpu_custom_call.1} parent=35 // pred_region
          %504 = vsyncadd %s496, 0
          %s505 = sadd.s32 %s32, %s31
          %s506 = sadd.s32 %s505, %s30
          %s507 = smul.addr %s506, 8
          %s508 = scalar_lea.hbm %s4, %s507
          %s510 = sshll.u32 %s499, 4
          %s511 = int_to_ptr.vmem [resolvable:$true] %s510
          %s512 = sshll.u32 %s508, 4
          %s513 = int_to_ptr.hbm [resolvable:$true] %s512
          %515 = dma.vmem_to_hbm [thread:$0]  %s511, 128, %s513, %s496
        $region56: #{tpu_custom_call.1} parent=35 // pred_fallthru
          _
      $region36: #{tpu_custom_call.1} parent=5 // pred_fallthru
        _
      %p516 = scmp.le.s32.totalorder 2, %s20
      // Predicated region
      $region57: #{tpu_custom_call.1} parent=5 // pred_check
        %p517 = pneg %p516
      $region58: #{tpu_custom_call.1} parent=5 // pred_check_branch
        %519 = sbr.rel (%p517) target = $region60
      $region59: #{tpu_custom_call.1} parent=5 // pred_region
        %s520 = ssub.s32 %s20, 2
        // Predicated region
        $region61: #{tpu_custom_call.1} parent=59 // pred_check
          %p521 = pneg %p170
        $region62: #{tpu_custom_call.1} parent=59 // pred_check_branch
          %523 = sbr.rel (%p521) target = $region64
        $region63: #{tpu_custom_call.1} parent=59 // pred_region
          %s524 = sand.u32 %s155, 1
          %s525 = scalar_lea.sflag [#allocation4], %s524
          %s526 = sand.u32 %s155, 1
          %s527 = smul.addr %s526, 8
          %s528 = scalar_lea.vmem [#allocation10], %s527
          %530 = dma.done %s525, 128
        $region64: #{tpu_custom_call.1} parent=59 // pred_fallthru
          _
      $region60: #{tpu_custom_call.1} parent=5 // pred_fallthru
        _
    $region6: #{tpu_custom_call.1} parent=1 // loop_footer
      %s24 = sadd.s32 1, %s20
    $region7: #{tpu_custom_call.1} parent=1 // loop_footer_branch
      %19 = sbr.rel target = $region3
    $region8: #{tpu_custom_call.1} parent=1 // loop_exit
      _
    %531 = vsyncpa [#allocation3], 1
    %s532 = scalar_lea.sflag [#allocation3], 1
    %533 = vsyncpa %s532, 1
    %534 = vsyncpa [#allocation6], 1
    %s535 = scalar_lea.sflag [#allocation6], 1
    %536 = vsyncpa %s535, 1
    %537 = vsyncpa [#allocation9], 1
    %538 = vsyncpa [#allocation4], 1
    %s539 = scalar_lea.sflag [#allocation4], 1
    %540 = vsyncpa %s539, 1

</llo_original>
